<compile_context>
chip_gen: v7x
topology: tpu7x:2x2x1
jax: 0.10.0
libtpu: 0.0.40
codegen_flags: <defaults>
</compile_context>

<pallas_src>
import math

import jax
import jax.numpy as jnp
from jax.experimental import pallas as pl
from jax.experimental.pallas import tpu as pltpu


# ---------------------------------------------------------------------------
# Parameter setup (equivalent of the PyTorch register_buffer)
# ---------------------------------------------------------------------------
def build_pe_table(d_model: int, max_len: int = 1000) -> jnp.ndarray:
    """Sinusoidal table, shape (max_len, d_model), f32. Handles odd d_model."""
    position = jnp.arange(max_len, dtype=jnp.float32)[:, None]            # (L, 1)
    div_term = jnp.exp(
        jnp.arange(0, d_model, 2, dtype=jnp.float32)
        * (-math.log(10000.0) / d_model)
    )                                                                      # (ceil(D/2),)
    pe = jnp.zeros((max_len, d_model), dtype=jnp.float32)
    pe = pe.at[:, 0::2].set(jnp.sin(position * div_term))
    n_cos = d_model // 2                                                   # guard odd d_model
    pe = pe.at[:, 1::2].set(jnp.cos(position * div_term[:n_cos]))
    return pe


def prepare_pe_for_batch(pe: jnp.ndarray, batch: int, dtype) -> jnp.ndarray:
    """One-time: broadcast over batch and cast to the model dtype.

    Returns shape (max_len, batch * d_model) so the forward kernel is a flat,
    lane-dense 2D add with zero per-call broadcast/cast work.
    """
    max_len, d_model = pe.shape
    pe_b = jnp.broadcast_to(pe[:, None, :], (max_len, batch, d_model))
    return pe_b.reshape(max_len, batch * d_model).astype(dtype)


# ---------------------------------------------------------------------------
# Pallas kernel (hot path): tiled elementwise add
# ---------------------------------------------------------------------------
def _pe_add_kernel(x_ref, pe_ref, o_ref):
    o_ref[...] = x_ref[...] + pe_ref[...]


def _choose_tile_rows(S: int, row_bytes: int, target_bytes: int = 2 << 20) -> int:
    """Pick a seq-tile size: ~0.5-2 MiB per buffer, multiple of 8 (or full S)."""
    if S * row_bytes <= target_bytes:
        return S                       # whole array in one block (full-dim block OK)
    ts = max(8, (target_bytes // row_bytes) // 8 * 8)
    return int(min(ts, S))


def positional_encoding_forward(x: jnp.ndarray,
                                pe_flat: jnp.ndarray,
                                *,
                                tile_rows: int | None = None) -> jnp.ndarray:
    """x: (seq_len, batch, d_model); pe_flat: (max_len, batch*d_model), same dtype.

    Returns x + pe[:seq_len] (broadcast over batch), computed as a tiled,
    pipelined 2D add over the (S, B*D) view.
    """
    S, B, D = x.shape
    row = B * D
    assert pe_flat.shape[1] == row, "pe_flat must be prepared for this batch/d_model"
    if pe_flat.dtype != x.dtype:       # safety net; normally pre-cast at setup
        pe_flat = pe_flat.astype(x.dtype)

    x2 = x.reshape(S, row)             # lane-dense view; last dim is full array dim

    itemsize = jnp.dtype(x.dtype).itemsize
    ts = int(tile_rows) if tile_rows is not None else _choose_tile_rows(S, row * itemsize)
    grid = (pl.cdiv(S, ts),)

    out2 = pl.pallas_call(
        _pe_add_kernel,
        out_shape=jax.ShapeDtypeStruct((S, row), x.dtype),
        grid=grid,
        in_specs=[
            pl.BlockSpec((ts, row), lambda i: (i, 0)),   # x tile
            pl.BlockSpec((ts, row), lambda i: (i, 0)),   # pe rows, read from full table
        ],
        out_specs=pl.BlockSpec((ts, row), lambda i: (i, 0)),
        compiler_params=pltpu.CompilerParams(
            dimension_semantics=("parallel",),           # shard seq tiles across TCs (v7x)
        ),
    )(x2, pe_flat)

    return out2.reshape(S, B, D)


# ---------------------------------------------------------------------------
# Self-test
# ---------------------------------------------------------------------------
if __name__ == "__main__":
    max_len = 1000
    d_model = 32
    batch = 2

    pe = build_pe_table(d_model, max_len)                      # (1000, 32) f32

    key = jax.random.PRNGKey(0)
    k1, k2 = jax.random.split(key)

    # Case 1: small shape from the module (single-tile path).
    seq_len = 8
    x = jax.random.normal(k1, (seq_len, batch, d_model), dtype=jnp.float32)
    pe_flat = prepare_pe_for_batch(pe, batch, x.dtype)          # (1000, 64)
    out = jax.block_until_ready(positional_encoding_forward(x, pe_flat))
    ref = x + pe[:seq_len][:, None, :]
    assert out.shape == (seq_len, batch, d_model)
    assert jnp.allclose(out, ref, atol=1e-6, rtol=1e-6)

    # Case 2: longer sequence with an explicit small tile so the multi-tile,
    # partial-last-block, pipelined path is exercised (grid = cdiv(72,16) = 5).
    seq_len2 = 72
    x2 = jax.random.normal(k2, (seq_len2, batch, d_model), dtype=jnp.float32)
    out2 = jax.block_until_ready(
        positional_encoding_forward(x2, pe_flat, tile_rows=16))
    ref2 = x2 + pe[:seq_len2][:, None, :]
    assert out2.shape == (seq_len2, batch, d_model)
    assert jnp.allclose(out2, ref2, atol=1e-6, rtol=1e-6)

    print("KERNEL_OK")
</pallas_src>

<mosaic_0001>
module attributes {stable_mosaic.version = 11 : i64} {
  func.func @_pe_add_kernel(%arg0: i32, %arg1: memref<8x64xf32, #tpu.memory_space<vmem>>, %arg2: memref<8x64xf32, #tpu.memory_space<vmem>>, %arg3: memref<8x64xf32, #tpu.memory_space<vmem>>) attributes {dimension_semantics = [#tpu.dimension_semantics<parallel>], iteration_bounds = array<i64: 1>, scalar_prefetch = 0 : i64, scratch_operands = 0 : i64, tpu.core_type = #tpu.core_type<tc>, window_params = [{transform_indices = @transform_0, window_bounds = array<i64: 8, 64>}, {transform_indices = @transform_1, window_bounds = array<i64: 8, 64>}, {transform_indices = @transform_2, window_bounds = array<i64: 8, 64>}]} {
    %c0 = arith.constant 0 : index
    %c0_0 = arith.constant 0 : index
    %0 = vector.load %arg1[%c0, %c0_0] : memref<8x64xf32, #tpu.memory_space<vmem>>, vector<8x64xf32>
    %c0_1 = arith.constant 0 : index
    %c0_2 = arith.constant 0 : index
    %1 = vector.load %arg2[%c0_1, %c0_2] : memref<8x64xf32, #tpu.memory_space<vmem>>, vector<8x64xf32>
    %2 = arith.addf %0, %1 : vector<8x64xf32>
    %c0_3 = arith.constant 0 : index
    %c0_4 = arith.constant 0 : index
    %3 = vector.load %arg3[%c0_3, %c0_4] : memref<8x64xf32, #tpu.memory_space<vmem>>, vector<8x64xf32>
    tpu.vector_store %arg3[%c0_3, %c0_4], %2 {strides = array<i32>} : memref<8x64xf32, #tpu.memory_space<vmem>>, vector<8x64xf32>,
    return
  }
  func.func @transform_0(%arg0: i32) -> (i32, i32) {
    %c0_i32 = arith.constant 0 : i32
    %c0_i32_0 = arith.constant 0 : i32
    return %arg0, %c0_i32 : i32, i32
  }
  func.func @transform_1(%arg0: i32) -> (i32, i32) {
    %c0_i32 = arith.constant 0 : i32
    %c0_i32_0 = arith.constant 0 : i32
    return %arg0, %c0_i32 : i32, i32
  }
  func.func @transform_2(%arg0: i32) -> (i32, i32) {
    %c0_i32 = arith.constant 0 : i32
    %c0_i32_0 = arith.constant 0 : i32
    return %arg0, %c0_i32 : i32, i32
  }
}

</mosaic_0001>

<llo_original>
// kernel: tpu_custom_call.1
$region0: #{tpu_custom_call.1}
  #allocation0 [shape = 'u32[]', space=smem, size = 0x4, offset = 0x4, fixed_abs, tag = 'smem constant byte address 0x4 - core index']
  #allocation1 [shape = 'u32[144,128]{1,0:T(1,128)}', space=vmem, size = 0x12000, scoped, tag = 'internal scratch']
  %s0 = inlined_call_operand.vmem [shape: f32[8,64], index: 0, kind: input, shape index: {}]
  %s1 = inlined_call_operand.vmem [shape: f32[1000,64], index: 1, kind: input, shape index: {}]
  %s2 = inlined_call_operand.hbm [shape: f32[8,64], index: 2, kind: output, shape index: {}]
  %s3 = sld [smem:[#allocation0]]
  $region18: #{tpu_custom_call.1} parent=0
    _
  %s5 = ssub.s32 1, %s3
  %s6 = scalar_select 0, %s5, %s3
  $region1: #{tpu_custom_call.1} parent=0
    #allocation2 [shape = 'u8[4096]{0}', space=vmem, size = 0x1000, scoped, tag = 'output window, operand 0, single buffered']
    #allocation3 [shape = 's32[1]{0}', space=sflag, size = 0x4, scoped, tag = 'scoped memory for tpu_custom_call.1']
    %7 = vsyncpa [#allocation3], 0
    // Predicated region
    $region2: #{tpu_custom_call.1} parent=1 // pred_check
      _
    $region3: #{tpu_custom_call.1} parent=1 // pred_check_branch
      %9 = sbr.rel (0) target = $region5
    $region4: #{tpu_custom_call.1} parent=1 // pred_region
      _
    $region5: #{tpu_custom_call.1} parent=1 // pred_fallthru
      _
    // Predicated region
    $region6: #{tpu_custom_call.1} parent=1 // pred_check
      _
    $region7: #{tpu_custom_call.1} parent=1 // pred_check_branch
      %11 = sbr.rel (0) target = $region9
    $region8: #{tpu_custom_call.1} parent=1 // pred_region
      _
    $region9: #{tpu_custom_call.1} parent=1 // pred_fallthru
      _
    %v12 = vld [vmem:[%s0] sm:$0xff]
    %v13 = vld [vmem:[%s1] sm:$0xff]
    %v14 = vadd.f32 %v12, %v13
    %vm15 = vcmask 523264
    %16 = vst.msk [vmem:[#allocation2] sm:$0xff] %vm15, %v14
    // Predicated region
    $region10: #{tpu_custom_call.1} parent=1 // pred_check
      _
    $region11: #{tpu_custom_call.1} parent=1 // pred_check_branch
      %18 = sbr.rel (0) target = $region13
    $region12: #{tpu_custom_call.1} parent=1 // pred_region
      %s20 = ssub.s32 128, 128
      %21 = vsyncadd [#allocation3], %s20
      %s23 = sshll.u32 [#allocation2], 4
      %s24 = int_to_ptr.vmem [resolvable:$true] %s23
      %26 = dma.vmem_to_hbm [thread:$0]  %s24, 128, %s2, [#allocation3]
    $region13: #{tpu_custom_call.1} parent=1 // pred_fallthru
      _
    // Predicated region
    $region14: #{tpu_custom_call.1} parent=1 // pred_check
      _
    $region15: #{tpu_custom_call.1} parent=1 // pred_check_branch
      %28 = sbr.rel (0) target = $region17
    $region16: #{tpu_custom_call.1} parent=1 // pred_region
      %29 = dma.done [#allocation3], 128
    $region17: #{tpu_custom_call.1} parent=1 // pred_fallthru
      _
    %30 = vsyncpa [#allocation3], 1

</llo_original>
